<compile_context>
chip_gen: v7x
topology: tpu7x:2x2x1
jax: 0.10.0
libtpu: 0.0.40
codegen_flags: <defaults>
</compile_context>

<pallas_src>
import jax
import jax.numpy as jnp
from jax.experimental import pallas as pl
from jax.experimental.pallas import tpu as pltpu

_BIG = 3.0e38        # min-accumulator init (< f32 max, > any real distance)
_SURF_PAD = 1.0e18   # sentinel for padded surface points
_TGT_PAD = -1.0e18   # sentinel for padded targets (opposite sign so a padded
                     # point vs. padded target distance is huge, never 0)
_NC = 8              # in-kernel streaming chunk: sublanes of points per step


def _round_up(x, m):
    return (x + m - 1) // m * m


def _choose_mt(M, cap=1024):
    """Multiple-of-128 target tile that divides round_up(M, 128)."""
    mp0 = _round_up(M, 128)
    mt = min(cap, mp0)
    mt -= mt % 128
    while mt > 128 and mp0 % mt != 0:
        mt -= 128
    return mt


def _choose_nt(N, cap=256):
    """Multiple-of-8 point tile Nt and the padded point count Np it divides."""
    np0 = _round_up(N, 8)
    nt = min(cap, np0)
    nt -= nt % 8
    while nt >= 64 and np0 % nt != 0:
        nt -= 8
    if np0 % nt != 0:
        # No decent divisor: pad N up to a multiple of the capped tile instead.
        nt = min(cap, np0)
        nt -= nt % 8
        return nt, _round_up(np0, nt)
    return nt, np0


def _choose_sb(S, Nt, budget_bytes=4 * 1024 * 1024):
    """Surfaces per block, budgeted at the K->128 lane-padded VMEM footprint."""
    per_surf = Nt * 128 * 4 * 2            # padded f32 block, x2 double buffer
    sb = max(1, min(S, 8, budget_bytes // per_surf))
    while S % sb != 0:
        sb -= 1
    return sb


def _vmem_limit_bytes():
    """Generation-aware scoped-VMEM limit (v7x has only 64 MiB physical)."""
    try:
        cap = int(pltpu.get_tpu_info().vmem_capacity_bytes)
        return int(min(max(cap // 2, 16 * 1024 * 1024), 64 * 1024 * 1024))
    except Exception:
        return 32 * 1024 * 1024


def _make_kernel(dim, Sb, Nt, K, Mt):
    num_chunks = Nt // _NC

    def kernel(surf_ref, tgt_ref, out_ref, acc_ref):
        # surf_ref: (Sb, Nt, K)   block of surface points
        # tgt_ref : (K, Mt)       target tile, targets lane-dense
        # out_ref : (1, Mt) [dim==0]  or  (1, 1, Sb) [dim==1]
        # acc_ref : VMEM scratch, same shape as out block; accumulates the min
        #           across the two inner ('arbitrary') grid axes.
        i1 = pl.program_id(1)
        i2 = pl.program_id(2)
        first = jnp.logical_and(i1 == 0, i2 == 0)
        last = jnp.logical_and(i1 == pl.num_programs(1) - 1,
                               i2 == pl.num_programs(2) - 1)

        @pl.when(first)
        def _init():
            acc_ref[...] = jnp.full(acc_ref.shape, _BIG, jnp.float32)

        b = tgt_ref[...]                                        # (K, Mt)

        def surf_running_min(s, acc):
            # Stream (_NC, Mt) chunks; dist never leaves vregs.
            for c in range(num_chunks):
                chunk = surf_ref[s, c * _NC:(c + 1) * _NC, :]   # (_NC, K)
                dist = None
                for k in range(K):
                    d = chunk[:, k:k + 1] - b[k:k + 1, :]       # (_NC, Mt)
                    dist = d * d if dist is None else dist + d * d
                acc = jnp.minimum(acc, dist)
            return acc

        if dim == 0:
            # cloud2nearest: per-target min over every point of every surface
            # in this block / N-tile.
            acc = jnp.full((_NC, Mt), _BIG, jnp.float32)
            for s in range(Sb):
                acc = surf_running_min(s, acc)
            blk = jnp.min(acc, axis=0, keepdims=True)           # (1, Mt)
            acc_ref[...] = jnp.minimum(acc_ref[...], blk)
        else:
            # surface2nearest: per-surface min over (its points x this tile).
            # Sublane reduce first, then one lane reduce per surface.
            lane = jax.lax.broadcasted_iota(jnp.int32, (1, Sb), 1)
            per = jnp.full((1, Sb), _BIG, jnp.float32)
            for s in range(Sb):
                acc = surf_running_min(
                    s, jnp.full((_NC, Mt), _BIG, jnp.float32))
                m = jnp.min(acc, axis=0, keepdims=True)         # (1, Mt)
                m = jnp.min(m, axis=1, keepdims=True)           # (1, 1)
                per = jnp.where(lane == s, jnp.broadcast_to(m, (1, Sb)), per)
            acc_ref[...] = jnp.minimum(acc_ref[...], per.reshape(1, 1, Sb))

        @pl.when(last)
        def _store():
            out_ref[...] = acc_ref[...]

    return kernel


def dist_loss(surfaces, targets, direction="cloud2nearest"):
    """surfaces: (S, N, K) pre-evaluated surface point clouds, targets: (M, K)."""
    dim = 0 if direction == "cloud2nearest" else 1
    surfaces = jnp.asarray(surfaces, jnp.float32)
    targets = jnp.asarray(targets, jnp.float32)
    S, N, K = surfaces.shape
    M, K2 = targets.shape
    assert K == K2

    # Targets: transpose to (K, M) (targets on the lane axis) and pad M to a
    # multiple of 128.  Padded columns use a sentinel and are excluded from the
    # dim==0 sum below.
    Mt = _choose_mt(M)
    Mp = _round_up(M, 128)
    assert Mp % Mt == 0
    tgt_t = targets.T
    if Mp != M:
        tgt_t = jnp.concatenate(
            [tgt_t, jnp.full((K, Mp - M), _TGT_PAD, jnp.float32)], axis=1)

    # Surfaces: pad the point axis so N tiles are sublane-aligned.  Sentinel
    # points are far from everything, so they never win a min.
    Nt, Np = _choose_nt(N)
    surf_p = surfaces
    if Np != N:
        surf_p = jnp.concatenate(
            [surfaces, jnp.full((S, Np - N, K), _SURF_PAD, jnp.float32)],
            axis=1)

    Sb = _choose_sb(S, Nt)
    num_sb, num_mb, num_nb = S // Sb, Mp // Mt, Np // Nt

    kernel = _make_kernel(dim, Sb, Nt, K, Mt)

    if dim == 0:
        # Parallel over target tiles; reduce (accumulate) over surface blocks
        # and N tiles inside the kernel.
        grid = (num_mb, num_sb, num_nb)
        in_specs = [
            pl.BlockSpec((Sb, Nt, K), lambda mb, sb, nb: (sb, nb, 0)),
            pl.BlockSpec((K, Mt), lambda mb, sb, nb: (0, mb)),
        ]
        out_shape = jax.ShapeDtypeStruct((1, Mp), jnp.float32)
        out_specs = pl.BlockSpec((1, Mt), lambda mb, sb, nb: (0, mb))
        scratch = [pltpu.VMEM((1, Mt), jnp.float32)]
    else:
        # Parallel over surface blocks; reduce over target tiles and N tiles
        # inside the kernel.  Output block is lane-dense (1, 1, Sb).
        grid = (num_sb, num_mb, num_nb)
        in_specs = [
            pl.BlockSpec((Sb, Nt, K), lambda sb, mb, nb: (sb, nb, 0)),
            pl.BlockSpec((K, Mt), lambda sb, mb, nb: (0, mb)),
        ]
        out_shape = jax.ShapeDtypeStruct((num_sb, 1, Sb), jnp.float32)
        out_specs = pl.BlockSpec((1, 1, Sb), lambda sb, mb, nb: (sb, 0, 0))
        scratch = [pltpu.VMEM((1, 1, Sb), jnp.float32)]

    mins = pl.pallas_call(
        kernel,
        out_shape=out_shape,
        grid=grid,
        in_specs=in_specs,
        out_specs=out_specs,
        scratch_shapes=scratch,
        compiler_params=pltpu.CompilerParams(
            dimension_semantics=("parallel", "arbitrary", "arbitrary"),
            vmem_limit_bytes=_vmem_limit_bytes(),
        ),
    )(surf_p, tgt_t)

    # Tiny final reduction in plain JAX.
    if dim == 0:
        return jnp.sum(mins[0, :M])   # drop padded target columns
    return jnp.sum(mins)              # every entry is a real surface (Sb | S)


def dist_loss_ref(surfaces, targets, direction="cloud2nearest"):
    """Pure-JAX reference mirroring the PyTorch forward exactly."""
    dim = 0 if direction == "cloud2nearest" else 1
    nearest = []
    for s in range(surfaces.shape[0]):
        diff = surfaces[s][:, None, :] - targets[None, :, :]
        dist = jnp.einsum("ijk,ijk->ij", diff, diff)
        nearest.append(jnp.min(dist, axis=dim))
    nearest = jnp.stack(nearest)
    nearest = jnp.min(nearest, axis=dim)
    return jnp.sum(nearest)


if __name__ == "__main__":
    key = jax.random.PRNGKey(0)
    keys = jax.random.split(key, 6)

    configs = [
        ((2, 64, 3), (128, 3)),      # single grid step, both directions
        ((3, 32, 3), (256, 3)),      # surface batching
        ((12, 300, 3), (1500, 3)),   # padding (N 300->304, M 1500->1536) and
                                     # multi-step accumulation on all grid axes
    ]

    for idx, (sshape, tshape) in enumerate(configs):
        surfaces = jax.random.normal(keys[2 * idx], sshape, dtype=jnp.float32)
        targets = jax.random.normal(keys[2 * idx + 1], tshape, dtype=jnp.float32)
        for direction in ("cloud2nearest", "surface2nearest"):
            out = dist_loss(surfaces, targets, direction)
            jax.block_until_ready(out)
            ref = dist_loss_ref(surfaces, targets, direction)
            assert jnp.allclose(out, ref, rtol=2e-3, atol=1e-3), (
                idx, direction, float(out), float(ref))

    print("KERNEL_OK")
</pallas_src>

<mosaic_0001>
module attributes {stable_mosaic.version = 11 : i64} {
  func.func @kernel(%arg0: i32, %arg1: i32, %arg2: i32, %arg3: memref<2x64x3xf32, #tpu.memory_space<vmem>>, %arg4: memref<3x128xf32, #tpu.memory_space<vmem>>, %arg5: memref<1x128xf32, #tpu.memory_space<vmem>>, %arg6: memref<1x128xf32, #tpu.memory_space<vmem>>) attributes {dimension_semantics = [#tpu.dimension_semantics<parallel>, #tpu.dimension_semantics<arbitrary>, #tpu.dimension_semantics<arbitrary>], iteration_bounds = array<i64: 1, 1, 1>, scalar_prefetch = 0 : i64, scratch_operands = 1 : i64, tpu.core_type = #tpu.core_type<tc>, window_params = [{transform_indices = @transform_0, window_bounds = array<i64: 2, 64, 3>}, {transform_indices = @transform_1, window_bounds = array<i64: 3, 128>}, {transform_indices = @transform_2, window_bounds = array<i64: 1, 128>}]} {
    %c0_i32 = arith.constant 0 : i32
    %0 = arith.cmpi eq, %arg1, %c0_i32 : i32
    %c0_i32_0 = arith.constant 0 : i32
    %1 = arith.cmpi eq, %arg2, %c0_i32_0 : i32
    %2 = arith.andi %0, %1 : i1
    %c0_i32_1 = arith.constant 0 : i32
    %3 = arith.cmpi eq, %arg1, %c0_i32_1 : i32
    %c0_i32_2 = arith.constant 0 : i32
    %4 = arith.cmpi eq, %arg2, %c0_i32_2 : i32
    %5 = arith.andi %3, %4 : i1
    %6 = arith.extui %2 : i1 to i32
    %c0_i32_3 = arith.constant 0 : i32
    %7 = arith.cmpi ne, %6, %c0_i32_3 : i32
    scf.if %7 {
      %cst_51 = arith.constant 3.000000e+38 : f32
      %385 = vector.broadcast %cst_51 : f32 to vector<1x128xf32>
      %c0_52 = arith.constant 0 : index
      %c0_53 = arith.constant 0 : index
      %386 = vector.load %arg6[%c0_52, %c0_53] : memref<1x128xf32, #tpu.memory_space<vmem>>, vector<1x128xf32>
      tpu.vector_store %arg6[%c0_52, %c0_53], %385 {strides = array<i32>} : memref<1x128xf32, #tpu.memory_space<vmem>>, vector<1x128xf32>,
    } else {
    }
    %c0 = arith.constant 0 : index
    %c0_4 = arith.constant 0 : index
    %8 = vector.load %arg4[%c0, %c0_4] : memref<3x128xf32, #tpu.memory_space<vmem>>, vector<3x128xf32>
    %cst = arith.constant 3.000000e+38 : f32
    %9 = vector.broadcast %cst : f32 to vector<8x128xf32>
    %c0_5 = arith.constant 0 : index
    %c0_6 = arith.constant 0 : index
    %c0_7 = arith.constant 0 : index
    %10 = vector.load %arg3[%c0_5, %c0_6, %c0_7] : memref<2x64x3xf32, #tpu.memory_space<vmem>>, vector<1x8x3xf32>
    %11 = vector.shape_cast %10 : vector<1x8x3xf32> to vector<8x3xf32>
    %12 = vector.extract_strided_slice %11 {offsets = [0, 0], sizes = [8, 1], strides = [1, 1]} : vector<8x3xf32> to vector<8x1xf32>
    %13 = vector.extract_strided_slice %8 {offsets = [0, 0], sizes = [1, 128], strides = [1, 1]} : vector<3x128xf32> to vector<1x128xf32>
    %14 = vector.broadcast %12 : vector<8x1xf32> to vector<8x128xf32>
    %15 = vector.broadcast %13 : vector<1x128xf32> to vector<8x128xf32>
    %16 = arith.subf %14, %15 : vector<8x128xf32>
    %17 = arith.mulf %16, %16 : vector<8x128xf32>
    %18 = vector.extract_strided_slice %11 {offsets = [0, 1], sizes = [8, 1], strides = [1, 1]} : vector<8x3xf32> to vector<8x1xf32>
    %19 = vector.extract_strided_slice %8 {offsets = [1, 0], sizes = [1, 128], strides = [1, 1]} : vector<3x128xf32> to vector<1x128xf32>
    %20 = vector.broadcast %18 : vector<8x1xf32> to vector<8x128xf32>
    %21 = vector.broadcast %19 : vector<1x128xf32> to vector<8x128xf32>
    %22 = arith.subf %20, %21 : vector<8x128xf32>
    %23 = arith.mulf %22, %22 : vector<8x128xf32>
    %24 = arith.addf %17, %23 : vector<8x128xf32>
    %25 = vector.extract_strided_slice %11 {offsets = [0, 2], sizes = [8, 1], strides = [1, 1]} : vector<8x3xf32> to vector<8x1xf32>
    %26 = vector.extract_strided_slice %8 {offsets = [2, 0], sizes = [1, 128], strides = [1, 1]} : vector<3x128xf32> to vector<1x128xf32>
    %27 = vector.broadcast %25 : vector<8x1xf32> to vector<8x128xf32>
    %28 = vector.broadcast %26 : vector<1x128xf32> to vector<8x128xf32>
    %29 = arith.subf %27, %28 : vector<8x128xf32>
    %30 = arith.mulf %29, %29 : vector<8x128xf32>
    %31 = arith.addf %24, %30 : vector<8x128xf32>
    %32 = arith.minimumf %9, %31 : vector<8x128xf32>
    %c0_8 = arith.constant 0 : index
    %c8 = arith.constant 8 : index
    %c0_9 = arith.constant 0 : index
    %33 = vector.load %arg3[%c0_8, %c8, %c0_9] : memref<2x64x3xf32, #tpu.memory_space<vmem>>, vector<1x8x3xf32>
    %34 = vector.shape_cast %33 : vector<1x8x3xf32> to vector<8x3xf32>
    %35 = vector.extract_strided_slice %34 {offsets = [0, 0], sizes = [8, 1], strides = [1, 1]} : vector<8x3xf32> to vector<8x1xf32>
    %36 = vector.extract_strided_slice %8 {offsets = [0, 0], sizes = [1, 128], strides = [1, 1]} : vector<3x128xf32> to vector<1x128xf32>
    %37 = vector.broadcast %35 : vector<8x1xf32> to vector<8x128xf32>
    %38 = vector.broadcast %36 : vector<1x128xf32> to vector<8x128xf32>
    %39 = arith.subf %37, %38 : vector<8x128xf32>
    %40 = arith.mulf %39, %39 : vector<8x128xf32>
    %41 = vector.extract_strided_slice %34 {offsets = [0, 1], sizes = [8, 1], strides = [1, 1]} : vector<8x3xf32> to vector<8x1xf32>
    %42 = vector.extract_strided_slice %8 {offsets = [1, 0], sizes = [1, 128], strides = [1, 1]} : vector<3x128xf32> to vector<1x128xf32>
    %43 = vector.broadcast %41 : vector<8x1xf32> to vector<8x128xf32>
    %44 = vector.broadcast %42 : vector<1x128xf32> to vector<8x128xf32>
    %45 = arith.subf %43, %44 : vector<8x128xf32>
    %46 = arith.mulf %45, %45 : vector<8x128xf32>
    %47 = arith.addf %40, %46 : vector<8x128xf32>
    %48 = vector.extract_strided_slice %34 {offsets = [0, 2], sizes = [8, 1], strides = [1, 1]} : vector<8x3xf32> to vector<8x1xf32>
    %49 = vector.extract_strided_slice %8 {offsets = [2, 0], sizes = [1, 128], strides = [1, 1]} : vector<3x128xf32> to vector<1x128xf32>
    %50 = vector.broadcast %48 : vector<8x1xf32> to vector<8x128xf32>
    %51 = vector.broadcast %49 : vector<1x128xf32> to vector<8x128xf32>
    %52 = arith.subf %50, %51 : vector<8x128xf32>
    %53 = arith.mulf %52, %52 : vector<8x128xf32>
    %54 = arith.addf %47, %53 : vector<8x128xf32>
    %55 = arith.minimumf %32, %54 : vector<8x128xf32>
    %c0_10 = arith.constant 0 : index
    %c16 = arith.constant 16 : index
    %c0_11 = arith.constant 0 : index
    %56 = vector.load %arg3[%c0_10, %c16, %c0_11] : memref<2x64x3xf32, #tpu.memory_space<vmem>>, vector<1x8x3xf32>
    %57 = vector.shape_cast %56 : vector<1x8x3xf32> to vector<8x3xf32>
    %58 = vector.extract_strided_slice %57 {offsets = [0, 0], sizes = [8, 1], strides = [1, 1]} : vector<8x3xf32> to vector<8x1xf32>
    %59 = vector.extract_strided_slice %8 {offsets = [0, 0], sizes = [1, 128], strides = [1, 1]} : vector<3x128xf32> to vector<1x128xf32>
    %60 = vector.broadcast %58 : vector<8x1xf32> to vector<8x128xf32>
    %61 = vector.broadcast %59 : vector<1x128xf32> to vector<8x128xf32>
    %62 = arith.subf %60, %61 : vector<8x128xf32>
    %63 = arith.mulf %62, %62 : vector<8x128xf32>
    %64 = vector.extract_strided_slice %57 {offsets = [0, 1], sizes = [8, 1], strides = [1, 1]} : vector<8x3xf32> to vector<8x1xf32>
    %65 = vector.extract_strided_slice %8 {offsets = [1, 0], sizes = [1, 128], strides = [1, 1]} : vector<3x128xf32> to vector<1x128xf32>
    %66 = vector.broadcast %64 : vector<8x1xf32> to vector<8x128xf32>
    %67 = vector.broadcast %65 : vector<1x128xf32> to vector<8x128xf32>
    %68 = arith.subf %66, %67 : vector<8x128xf32>
    %69 = arith.mulf %68, %68 : vector<8x128xf32>
    %70 = arith.addf %63, %69 : vector<8x128xf32>
    %71 = vector.extract_strided_slice %57 {offsets = [0, 2], sizes = [8, 1], strides = [1, 1]} : vector<8x3xf32> to vector<8x1xf32>
    %72 = vector.extract_strided_slice %8 {offsets = [2, 0], sizes = [1, 128], strides = [1, 1]} : vector<3x128xf32> to vector<1x128xf32>
    %73 = vector.broadcast %71 : vector<8x1xf32> to vector<8x128xf32>
    %74 = vector.broadcast %72 : vector<1x128xf32> to vector<8x128xf32>
    %75 = arith.subf %73, %74 : vector<8x128xf32>
    %76 = arith.mulf %75, %75 : vector<8x128xf32>
    %77 = arith.addf %70, %76 : vector<8x128xf32>
    %78 = arith.minimumf %55, %77 : vector<8x128xf32>
    %c0_12 = arith.constant 0 : index
    %c24 = arith.constant 24 : index
    %c0_13 = arith.constant 0 : index
    %79 = vector.load %arg3[%c0_12, %c24, %c0_13] : memref<2x64x3xf32, #tpu.memory_space<vmem>>, vector<1x8x3xf32>
    %80 = vector.shape_cast %79 : vector<1x8x3xf32> to vector<8x3xf32>
    %81 = vector.extract_strided_slice %80 {offsets = [0, 0], sizes = [8, 1], strides = [1, 1]} : vector<8x3xf32> to vector<8x1xf32>
    %82 = vector.extract_strided_slice %8 {offsets = [0, 0], sizes = [1, 128], strides = [1, 1]} : vector<3x128xf32> to vector<1x128xf32>
    %83 = vector.broadcast %81 : vector<8x1xf32> to vector<8x128xf32>
    %84 = vector.broadcast %82 : vector<1x128xf32> to vector<8x128xf32>
    %85 = arith.subf %83, %84 : vector<8x128xf32>
    %86 = arith.mulf %85, %85 : vector<8x128xf32>
    %87 = vector.extract_strided_slice %80 {offsets = [0, 1], sizes = [8, 1], strides = [1, 1]} : vector<8x3xf32> to vector<8x1xf32>
    %88 = vector.extract_strided_slice %8 {offsets = [1, 0], sizes = [1, 128], strides = [1, 1]} : vector<3x128xf32> to vector<1x128xf32>
    %89 = vector.broadcast %87 : vector<8x1xf32> to vector<8x128xf32>
    %90 = vector.broadcast %88 : vector<1x128xf32> to vector<8x128xf32>
    %91 = arith.subf %89, %90 : vector<8x128xf32>
    %92 = arith.mulf %91, %91 : vector<8x128xf32>
    %93 = arith.addf %86, %92 : vector<8x128xf32>
    %94 = vector.extract_strided_slice %80 {offsets = [0, 2], sizes = [8, 1], strides = [1, 1]} : vector<8x3xf32> to vector<8x1xf32>
    %95 = vector.extract_strided_slice %8 {offsets = [2, 0], sizes = [1, 128], strides = [1, 1]} : vector<3x128xf32> to vector<1x128xf32>
    %96 = vector.broadcast %94 : vector<8x1xf32> to vector<8x128xf32>
    %97 = vector.broadcast %95 : vector<1x128xf32> to vector<8x128xf32>
    %98 = arith.subf %96, %97 : vector<8x128xf32>
    %99 = arith.mulf %98, %98 : vector<8x128xf32>
    %100 = arith.addf %93, %99 : vector<8x128xf32>
    %101 = arith.minimumf %78, %100 : vector<8x128xf32>
    %c0_14 = arith.constant 0 : index
    %c32 = arith.constant 32 : index
    %c0_15 = arith.constant 0 : index
    %102 = vector.load %arg3[%c0_14, %c32, %c0_15] : memref<2x64x3xf32, #tpu.memory_space<vmem>>, vector<1x8x3xf32>
    %103 = vector.shape_cast %102 : vector<1x8x3xf32> to vector<8x3xf32>
    %104 = vector.extract_strided_slice %103 {offsets = [0, 0], sizes = [8, 1], strides = [1, 1]} : vector<8x3xf32> to vector<8x1xf32>
    %105 = vector.extract_strided_slice %8 {offsets = [0, 0], sizes = [1, 128], strides = [1, 1]} : vector<3x128xf32> to vector<1x128xf32>
    %106 = vector.broadcast %104 : vector<8x1xf32> to vector<8x128xf32>
    %107 = vector.broadcast %105 : vector<1x128xf32> to vector<8x128xf32>
    %108 = arith.subf %106, %107 : vector<8x128xf32>
    %109 = arith.mulf %108, %108 : vector<8x128xf32>
    %110 = vector.extract_strided_slice %103 {offsets = [0, 1], sizes = [8, 1], strides = [1, 1]} : vector<8x3xf32> to vector<8x1xf32>
    %111 = vector.extract_strided_slice %8 {offsets = [1, 0], sizes = [1, 128], strides = [1, 1]} : vector<3x128xf32> to vector<1x128xf32>
    %112 = vector.broadcast %110 : vector<8x1xf32> to vector<8x128xf32>
    %113 = vector.broadcast %111 : vector<1x128xf32> to vector<8x128xf32>
    %114 = arith.subf %112, %113 : vector<8x128xf32>
    %115 = arith.mulf %114, %114 : vector<8x128xf32>
    %116 = arith.addf %109, %115 : vector<8x128xf32>
    %117 = vector.extract_strided_slice %103 {offsets = [0, 2], sizes = [8, 1], strides = [1, 1]} : vector<8x3xf32> to vector<8x1xf32>
    %118 = vector.extract_strided_slice %8 {offsets = [2, 0], sizes = [1, 128], strides = [1, 1]} : vector<3x128xf32> to vector<1x128xf32>
    %119 = vector.broadcast %117 : vector<8x1xf32> to vector<8x128xf32>
    %120 = vector.broadcast %118 : vector<1x128xf32> to vector<8x128xf32>
    %121 = arith.subf %119, %120 : vector<8x128xf32>
    %122 = arith.mulf %121, %121 : vector<8x128xf32>
    %123 = arith.addf %116, %122 : vector<8x128xf32>
    %124 = arith.minimumf %101, %123 : vector<8x128xf32>
    %c0_16 = arith.constant 0 : index
    %c40 = arith.constant 40 : index
    %c0_17 = arith.constant 0 : index
    %125 = vector.load %arg3[%c0_16, %c40, %c0_17] : memref<2x64x3xf32, #tpu.memory_space<vmem>>, vector<1x8x3xf32>
    %126 = vector.shape_cast %125 : vector<1x8x3xf32> to vector<8x3xf32>
    %127 = vector.extract_strided_slice %126 {offsets = [0, 0], sizes = [8, 1], strides = [1, 1]} : vector<8x3xf32> to vector<8x1xf32>
    %128 = vector.extract_strided_slice %8 {offsets = [0, 0], sizes = [1, 128], strides = [1, 1]} : vector<3x128xf32> to vector<1x128xf32>
    %129 = vector.broadcast %127 : vector<8x1xf32> to vector<8x128xf32>
    %130 = vector.broadcast %128 : vector<1x128xf32> to vector<8x128xf32>
    %131 = arith.subf %129, %130 : vector<8x128xf32>
    %132 = arith.mulf %131, %131 : vector<8x128xf32>
    %133 = vector.extract_strided_slice %126 {offsets = [0, 1], sizes = [8, 1], strides = [1, 1]} : vector<8x3xf32> to vector<8x1xf32>
    %134 = vector.extract_strided_slice %8 {offsets = [1, 0], sizes = [1, 128], strides = [1, 1]} : vector<3x128xf32> to vector<1x128xf32>
    %135 = vector.broadcast %133 : vector<8x1xf32> to vector<8x128xf32>
    %136 = vector.broadcast %134 : vector<1x128xf32> to vector<8x128xf32>
    %137 = arith.subf %135, %136 : vector<8x128xf32>
    %138 = arith.mulf %137, %137 : vector<8x128xf32>
    %139 = arith.addf %132, %138 : vector<8x128xf32>
    %140 = vector.extract_strided_slice %126 {offsets = [0, 2], sizes = [8, 1], strides = [1, 1]} : vector<8x3xf32> to vector<8x1xf32>
    %141 = vector.extract_strided_slice %8 {offsets = [2, 0], sizes = [1, 128], strides = [1, 1]} : vector<3x128xf32> to vector<1x128xf32>
    %142 = vector.broadcast %140 : vector<8x1xf32> to vector<8x128xf32>
    %143 = vector.broadcast %141 : vector<1x128xf32> to vector<8x128xf32>
    %144 = arith.subf %142, %143 : vector<8x128xf32>
    %145 = arith.mulf %144, %144 : vector<8x128xf32>
    %146 = arith.addf %139, %145 : vector<8x128xf32>
    %147 = arith.minimumf %124, %146 : vector<8x128xf32>
    %c0_18 = arith.constant 0 : index
    %c48 = arith.constant 48 : index
    %c0_19 = arith.constant 0 : index
    %148 = vector.load %arg3[%c0_18, %c48, %c0_19] : memref<2x64x3xf32, #tpu.memory_space<vmem>>, vector<1x8x3xf32>
    %149 = vector.shape_cast %148 : vector<1x8x3xf32> to vector<8x3xf32>
    %150 = vector.extract_strided_slice %149 {offsets = [0, 0], sizes = [8, 1], strides = [1, 1]} : vector<8x3xf32> to vector<8x1xf32>
    %151 = vector.extract_strided_slice %8 {offsets = [0, 0], sizes = [1, 128], strides = [1, 1]} : vector<3x128xf32> to vector<1x128xf32>
    %152 = vector.broadcast %150 : vector<8x1xf32> to vector<8x128xf32>
    %153 = vector.broadcast %151 : vector<1x128xf32> to vector<8x128xf32>
    %154 = arith.subf %152, %153 : vector<8x128xf32>
    %155 = arith.mulf %154, %154 : vector<8x128xf32>
    %156 = vector.extract_strided_slice %149 {offsets = [0, 1], sizes = [8, 1], strides = [1, 1]} : vector<8x3xf32> to vector<8x1xf32>
    %157 = vector.extract_strided_slice %8 {offsets = [1, 0], sizes = [1, 128], strides = [1, 1]} : vector<3x128xf32> to vector<1x128xf32>
    %158 = vector.broadcast %156 : vector<8x1xf32> to vector<8x128xf32>
    %159 = vector.broadcast %157 : vector<1x128xf32> to vector<8x128xf32>
    %160 = arith.subf %158, %159 : vector<8x128xf32>
    %161 = arith.mulf %160, %160 : vector<8x128xf32>
    %162 = arith.addf %155, %161 : vector<8x128xf32>
    %163 = vector.extract_strided_slice %149 {offsets = [0, 2], sizes = [8, 1], strides = [1, 1]} : vector<8x3xf32> to vector<8x1xf32>
    %164 = vector.extract_strided_slice %8 {offsets = [2, 0], sizes = [1, 128], strides = [1, 1]} : vector<3x128xf32> to vector<1x128xf32>
    %165 = vector.broadcast %163 : vector<8x1xf32> to vector<8x128xf32>
    %166 = vector.broadcast %164 : vector<1x128xf32> to vector<8x128xf32>
    %167 = arith.subf %165, %166 : vector<8x128xf32>
    %168 = arith.mulf %167, %167 : vector<8x128xf32>
    %169 = arith.addf %162, %168 : vector<8x128xf32>
    %170 = arith.minimumf %147, %169 : vector<8x128xf32>
    %c0_20 = arith.constant 0 : index
    %c56 = arith.constant 56 : index
    %c0_21 = arith.constant 0 : index
    %171 = vector.load %arg3[%c0_20, %c56, %c0_21] : memref<2x64x3xf32, #tpu.memory_space<vmem>>, vector<1x8x3xf32>
    %172 = vector.shape_cast %171 : vector<1x8x3xf32> to vector<8x3xf32>
    %173 = vector.extract_strided_slice %172 {offsets = [0, 0], sizes = [8, 1], strides = [1, 1]} : vector<8x3xf32> to vector<8x1xf32>
    %174 = vector.extract_strided_slice %8 {offsets = [0, 0], sizes = [1, 128], strides = [1, 1]} : vector<3x128xf32> to vector<1x128xf32>
    %175 = vector.broadcast %173 : vector<8x1xf32> to vector<8x128xf32>
    %176 = vector.broadcast %174 : vector<1x128xf32> to vector<8x128xf32>
    %177 = arith.subf %175, %176 : vector<8x128xf32>
    %178 = arith.mulf %177, %177 : vector<8x128xf32>
    %179 = vector.extract_strided_slice %172 {offsets = [0, 1], sizes = [8, 1], strides = [1, 1]} : vector<8x3xf32> to vector<8x1xf32>
    %180 = vector.extract_strided_slice %8 {offsets = [1, 0], sizes = [1, 128], strides = [1, 1]} : vector<3x128xf32> to vector<1x128xf32>
    %181 = vector.broadcast %179 : vector<8x1xf32> to vector<8x128xf32>
    %182 = vector.broadcast %180 : vector<1x128xf32> to vector<8x128xf32>
    %183 = arith.subf %181, %182 : vector<8x128xf32>
    %184 = arith.mulf %183, %183 : vector<8x128xf32>
    %185 = arith.addf %178, %184 : vector<8x128xf32>
    %186 = vector.extract_strided_slice %172 {offsets = [0, 2], sizes = [8, 1], strides = [1, 1]} : vector<8x3xf32> to vector<8x1xf32>
    %187 = vector.extract_strided_slice %8 {offsets = [2, 0], sizes = [1, 128], strides = [1, 1]} : vector<3x128xf32> to vector<1x128xf32>
    %188 = vector.broadcast %186 : vector<8x1xf32> to vector<8x128xf32>
    %189 = vector.broadcast %187 : vector<1x128xf32> to vector<8x128xf32>
    %190 = arith.subf %188, %189 : vector<8x128xf32>
    %191 = arith.mulf %190, %190 : vector<8x128xf32>
    %192 = arith.addf %185, %191 : vector<8x128xf32>
    %193 = arith.minimumf %170, %192 : vector<8x128xf32>
    %c1 = arith.constant 1 : index
    %c0_22 = arith.constant 0 : index
    %c0_23 = arith.constant 0 : index
    %194 = vector.load %arg3[%c1, %c0_22, %c0_23] : memref<2x64x3xf32, #tpu.memory_space<vmem>>, vector<1x8x3xf32>
    %195 = vector.shape_cast %194 : vector<1x8x3xf32> to vector<8x3xf32>
    %196 = vector.extract_strided_slice %195 {offsets = [0, 0], sizes = [8, 1], strides = [1, 1]} : vector<8x3xf32> to vector<8x1xf32>
    %197 = vector.extract_strided_slice %8 {offsets = [0, 0], sizes = [1, 128], strides = [1, 1]} : vector<3x128xf32> to vector<1x128xf32>
    %198 = vector.broadcast %196 : vector<8x1xf32> to vector<8x128xf32>
    %199 = vector.broadcast %197 : vector<1x128xf32> to vector<8x128xf32>
    %200 = arith.subf %198, %199 : vector<8x128xf32>
    %201 = arith.mulf %200, %200 : vector<8x128xf32>
    %202 = vector.extract_strided_slice %195 {offsets = [0, 1], sizes = [8, 1], strides = [1, 1]} : vector<8x3xf32> to vector<8x1xf32>
    %203 = vector.extract_strided_slice %8 {offsets = [1, 0], sizes = [1, 128], strides = [1, 1]} : vector<3x128xf32> to vector<1x128xf32>
    %204 = vector.broadcast %202 : vector<8x1xf32> to vector<8x128xf32>
    %205 = vector.broadcast %203 : vector<1x128xf32> to vector<8x128xf32>
    %206 = arith.subf %204, %205 : vector<8x128xf32>
    %207 = arith.mulf %206, %206 : vector<8x128xf32>
    %208 = arith.addf %201, %207 : vector<8x128xf32>
    %209 = vector.extract_strided_slice %195 {offsets = [0, 2], sizes = [8, 1], strides = [1, 1]} : vector<8x3xf32> to vector<8x1xf32>
    %210 = vector.extract_strided_slice %8 {offsets = [2, 0], sizes = [1, 128], strides = [1, 1]} : vector<3x128xf32> to vector<1x128xf32>
    %211 = vector.broadcast %209 : vector<8x1xf32> to vector<8x128xf32>
    %212 = vector.broadcast %210 : vector<1x128xf32> to vector<8x128xf32>
    %213 = arith.subf %211, %212 : vector<8x128xf32>
    %214 = arith.mulf %213, %213 : vector<8x128xf32>
    %215 = arith.addf %208, %214 : vector<8x128xf32>
    %216 = arith.minimumf %193, %215 : vector<8x128xf32>
    %c1_24 = arith.constant 1 : index
    %c8_25 = arith.constant 8 : index
    %c0_26 = arith.constant 0 : index
    %217 = vector.load %arg3[%c1_24, %c8_25, %c0_26] : memref<2x64x3xf32, #tpu.memory_space<vmem>>, vector<1x8x3xf32>
    %218 = vector.shape_cast %217 : vector<1x8x3xf32> to vector<8x3xf32>
    %219 = vector.extract_strided_slice %218 {offsets = [0, 0], sizes = [8, 1], strides = [1, 1]} : vector<8x3xf32> to vector<8x1xf32>
    %220 = vector.extract_strided_slice %8 {offsets = [0, 0], sizes = [1, 128], strides = [1, 1]} : vector<3x128xf32> to vector<1x128xf32>
    %221 = vector.broadcast %219 : vector<8x1xf32> to vector<8x128xf32>
    %222 = vector.broadcast %220 : vector<1x128xf32> to vector<8x128xf32>
    %223 = arith.subf %221, %222 : vector<8x128xf32>
    %224 = arith.mulf %223, %223 : vector<8x128xf32>
    %225 = vector.extract_strided_slice %218 {offsets = [0, 1], sizes = [8, 1], strides = [1, 1]} : vector<8x3xf32> to vector<8x1xf32>
    %226 = vector.extract_strided_slice %8 {offsets = [1, 0], sizes = [1, 128], strides = [1, 1]} : vector<3x128xf32> to vector<1x128xf32>
    %227 = vector.broadcast %225 : vector<8x1xf32> to vector<8x128xf32>
    %228 = vector.broadcast %226 : vector<1x128xf32> to vector<8x128xf32>
    %229 = arith.subf %227, %228 : vector<8x128xf32>
    %230 = arith.mulf %229, %229 : vector<8x128xf32>
    %231 = arith.addf %224, %230 : vector<8x128xf32>
    %232 = vector.extract_strided_slice %218 {offsets = [0, 2], sizes = [8, 1], strides = [1, 1]} : vector<8x3xf32> to vector<8x1xf32>
    %233 = vector.extract_strided_slice %8 {offsets = [2, 0], sizes = [1, 128], strides = [1, 1]} : vector<3x128xf32> to vector<1x128xf32>
    %234 = vector.broadcast %232 : vector<8x1xf32> to vector<8x128xf32>
    %235 = vector.broadcast %233 : vector<1x128xf32> to vector<8x128xf32>
    %236 = arith.subf %234, %235 : vector<8x128xf32>
    %237 = arith.mulf %236, %236 : vector<8x128xf32>
    %238 = arith.addf %231, %237 : vector<8x128xf32>
    %239 = arith.minimumf %216, %238 : vector<8x128xf32>
    %c1_27 = arith.constant 1 : index
    %c16_28 = arith.constant 16 : index
    %c0_29 = arith.constant 0 : index
    %240 = vector.load %arg3[%c1_27, %c16_28, %c0_29] : memref<2x64x3xf32, #tpu.memory_space<vmem>>, vector<1x8x3xf32>
    %241 = vector.shape_cast %240 : vector<1x8x3xf32> to vector<8x3xf32>
    %242 = vector.extract_strided_slice %241 {offsets = [0, 0], sizes = [8, 1], strides = [1, 1]} : vector<8x3xf32> to vector<8x1xf32>
    %243 = vector.extract_strided_slice %8 {offsets = [0, 0], sizes = [1, 128], strides = [1, 1]} : vector<3x128xf32> to vector<1x128xf32>
    %244 = vector.broadcast %242 : vector<8x1xf32> to vector<8x128xf32>
    %245 = vector.broadcast %243 : vector<1x128xf32> to vector<8x128xf32>
    %246 = arith.subf %244, %245 : vector<8x128xf32>
    %247 = arith.mulf %246, %246 : vector<8x128xf32>
    %248 = vector.extract_strided_slice %241 {offsets = [0, 1], sizes = [8, 1], strides = [1, 1]} : vector<8x3xf32> to vector<8x1xf32>
    %249 = vector.extract_strided_slice %8 {offsets = [1, 0], sizes = [1, 128], strides = [1, 1]} : vector<3x128xf32> to vector<1x128xf32>
    %250 = vector.broadcast %248 : vector<8x1xf32> to vector<8x128xf32>
    %251 = vector.broadcast %249 : vector<1x128xf32> to vector<8x128xf32>
    %252 = arith.subf %250, %251 : vector<8x128xf32>
    %253 = arith.mulf %252, %252 : vector<8x128xf32>
    %254 = arith.addf %247, %253 : vector<8x128xf32>
    %255 = vector.extract_strided_slice %241 {offsets = [0, 2], sizes = [8, 1], strides = [1, 1]} : vector<8x3xf32> to vector<8x1xf32>
    %256 = vector.extract_strided_slice %8 {offsets = [2, 0], sizes = [1, 128], strides = [1, 1]} : vector<3x128xf32> to vector<1x128xf32>
    %257 = vector.broadcast %255 : vector<8x1xf32> to vector<8x128xf32>
    %258 = vector.broadcast %256 : vector<1x128xf32> to vector<8x128xf32>
    %259 = arith.subf %257, %258 : vector<8x128xf32>
    %260 = arith.mulf %259, %259 : vector<8x128xf32>
    %261 = arith.addf %254, %260 : vector<8x128xf32>
    %262 = arith.minimumf %239, %261 : vector<8x128xf32>
    %c1_30 = arith.constant 1 : index
    %c24_31 = arith.constant 24 : index
    %c0_32 = arith.constant 0 : index
    %263 = vector.load %arg3[%c1_30, %c24_31, %c0_32] : memref<2x64x3xf32, #tpu.memory_space<vmem>>, vector<1x8x3xf32>
    %264 = vector.shape_cast %263 : vector<1x8x3xf32> to vector<8x3xf32>
    %265 = vector.extract_strided_slice %264 {offsets = [0, 0], sizes = [8, 1], strides = [1, 1]} : vector<8x3xf32> to vector<8x1xf32>
    %266 = vector.extract_strided_slice %8 {offsets = [0, 0], sizes = [1, 128], strides = [1, 1]} : vector<3x128xf32> to vector<1x128xf32>
    %267 = vector.broadcast %265 : vector<8x1xf32> to vector<8x128xf32>
    %268 = vector.broadcast %266 : vector<1x128xf32> to vector<8x128xf32>
    %269 = arith.subf %267, %268 : vector<8x128xf32>
    %270 = arith.mulf %269, %269 : vector<8x128xf32>
    %271 = vector.extract_strided_slice %264 {offsets = [0, 1], sizes = [8, 1], strides = [1, 1]} : vector<8x3xf32> to vector<8x1xf32>
    %272 = vector.extract_strided_slice %8 {offsets = [1, 0], sizes = [1, 128], strides = [1, 1]} : vector<3x128xf32> to vector<1x128xf32>
    %273 = vector.broadcast %271 : vector<8x1xf32> to vector<8x128xf32>
    %274 = vector.broadcast %272 : vector<1x128xf32> to vector<8x128xf32>
    %275 = arith.subf %273, %274 : vector<8x128xf32>
    %276 = arith.mulf %275, %275 : vector<8x128xf32>
    %277 = arith.addf %270, %276 : vector<8x128xf32>
    %278 = vector.extract_strided_slice %264 {offsets = [0, 2], sizes = [8, 1], strides = [1, 1]} : vector<8x3xf32> to vector<8x1xf32>
    %279 = vector.extract_strided_slice %8 {offsets = [2, 0], sizes = [1, 128], strides = [1, 1]} : vector<3x128xf32> to vector<1x128xf32>
    %280 = vector.broadcast %278 : vector<8x1xf32> to vector<8x128xf32>
    %281 = vector.broadcast %279 : vector<1x128xf32> to vector<8x128xf32>
    %282 = arith.subf %280, %281 : vector<8x128xf32>
    %283 = arith.mulf %282, %282 : vector<8x128xf32>
    %284 = arith.addf %277, %283 : vector<8x128xf32>
    %285 = arith.minimumf %262, %284 : vector<8x128xf32>
    %c1_33 = arith.constant 1 : index
    %c32_34 = arith.constant 32 : index
    %c0_35 = arith.constant 0 : index
    %286 = vector.load %arg3[%c1_33, %c32_34, %c0_35] : memref<2x64x3xf32, #tpu.memory_space<vmem>>, vector<1x8x3xf32>
    %287 = vector.shape_cast %286 : vector<1x8x3xf32> to vector<8x3xf32>
    %288 = vector.extract_strided_slice %287 {offsets = [0, 0], sizes = [8, 1], strides = [1, 1]} : vector<8x3xf32> to vector<8x1xf32>
    %289 = vector.extract_strided_slice %8 {offsets = [0, 0], sizes = [1, 128], strides = [1, 1]} : vector<3x128xf32> to vector<1x128xf32>
    %290 = vector.broadcast %288 : vector<8x1xf32> to vector<8x128xf32>
    %291 = vector.broadcast %289 : vector<1x128xf32> to vector<8x128xf32>
    %292 = arith.subf %290, %291 : vector<8x128xf32>
    %293 = arith.mulf %292, %292 : vector<8x128xf32>
    %294 = vector.extract_strided_slice %287 {offsets = [0, 1], sizes = [8, 1], strides = [1, 1]} : vector<8x3xf32> to vector<8x1xf32>
    %295 = vector.extract_strided_slice %8 {offsets = [1, 0], sizes = [1, 128], strides = [1, 1]} : vector<3x128xf32> to vector<1x128xf32>
    %296 = vector.broadcast %294 : vector<8x1xf32> to vector<8x128xf32>
    %297 = vector.broadcast %295 : vector<1x128xf32> to vector<8x128xf32>
    %298 = arith.subf %296, %297 : vector<8x128xf32>
    %299 = arith.mulf %298, %298 : vector<8x128xf32>
    %300 = arith.addf %293, %299 : vector<8x128xf32>
    %301 = vector.extract_strided_slice %287 {offsets = [0, 2], sizes = [8, 1], strides = [1, 1]} : vector<8x3xf32> to vector<8x1xf32>
    %302 = vector.extract_strided_slice %8 {offsets = [2, 0], sizes = [1, 128], strides = [1, 1]} : vector<3x128xf32> to vector<1x128xf32>
    %303 = vector.broadcast %301 : vector<8x1xf32> to vector<8x128xf32>
    %304 = vector.broadcast %302 : vector<1x128xf32> to vector<8x128xf32>
    %305 = arith.subf %303, %304 : vector<8x128xf32>
    %306 = arith.mulf %305, %305 : vector<8x128xf32>
    %307 = arith.addf %300, %306 : vector<8x128xf32>
    %308 = arith.minimumf %285, %307 : vector<8x128xf32>
    %c1_36 = arith.constant 1 : index
    %c40_37 = arith.constant 40 : index
    %c0_38 = arith.constant 0 : index
    %309 = vector.load %arg3[%c1_36, %c40_37, %c0_38] : memref<2x64x3xf32, #tpu.memory_space<vmem>>, vector<1x8x3xf32>
    %310 = vector.shape_cast %309 : vector<1x8x3xf32> to vector<8x3xf32>
    %311 = vector.extract_strided_slice %310 {offsets = [0, 0], sizes = [8, 1], strides = [1, 1]} : vector<8x3xf32> to vector<8x1xf32>
    %312 = vector.extract_strided_slice %8 {offsets = [0, 0], sizes = [1, 128], strides = [1, 1]} : vector<3x128xf32> to vector<1x128xf32>
    %313 = vector.broadcast %311 : vector<8x1xf32> to vector<8x128xf32>
    %314 = vector.broadcast %312 : vector<1x128xf32> to vector<8x128xf32>
    %315 = arith.subf %313, %314 : vector<8x128xf32>
    %316 = arith.mulf %315, %315 : vector<8x128xf32>
    %317 = vector.extract_strided_slice %310 {offsets = [0, 1], sizes = [8, 1], strides = [1, 1]} : vector<8x3xf32> to vector<8x1xf32>
    %318 = vector.extract_strided_slice %8 {offsets = [1, 0], sizes = [1, 128], strides = [1, 1]} : vector<3x128xf32> to vector<1x128xf32>
    %319 = vector.broadcast %317 : vector<8x1xf32> to vector<8x128xf32>
    %320 = vector.broadcast %318 : vector<1x128xf32> to vector<8x128xf32>
    %321 = arith.subf %319, %320 : vector<8x128xf32>
    %322 = arith.mulf %321, %321 : vector<8x128xf32>
    %323 = arith.addf %316, %322 : vector<8x128xf32>
    %324 = vector.extract_strided_slice %310 {offsets = [0, 2], sizes = [8, 1], strides = [1, 1]} : vector<8x3xf32> to vector<8x1xf32>
    %325 = vector.extract_strided_slice %8 {offsets = [2, 0], sizes = [1, 128], strides = [1, 1]} : vector<3x128xf32> to vector<1x128xf32>
    %326 = vector.broadcast %324 : vector<8x1xf32> to vector<8x128xf32>
    %327 = vector.broadcast %325 : vector<1x128xf32> to vector<8x128xf32>
    %328 = arith.subf %326, %327 : vector<8x128xf32>
    %329 = arith.mulf %328, %328 : vector<8x128xf32>
    %330 = arith.addf %323, %329 : vector<8x128xf32>
    %331 = arith.minimumf %308, %330 : vector<8x128xf32>
    %c1_39 = arith.constant 1 : index
    %c48_40 = arith.constant 48 : index
    %c0_41 = arith.constant 0 : index
    %332 = vector.load %arg3[%c1_39, %c48_40, %c0_41] : memref<2x64x3xf32, #tpu.memory_space<vmem>>, vector<1x8x3xf32>
    %333 = vector.shape_cast %332 : vector<1x8x3xf32> to vector<8x3xf32>
    %334 = vector.extract_strided_slice %333 {offsets = [0, 0], sizes = [8, 1], strides = [1, 1]} : vector<8x3xf32> to vector<8x1xf32>
    %335 = vector.extract_strided_slice %8 {offsets = [0, 0], sizes = [1, 128], strides = [1, 1]} : vector<3x128xf32> to vector<1x128xf32>
    %336 = vector.broadcast %334 : vector<8x1xf32> to vector<8x128xf32>
    %337 = vector.broadcast %335 : vector<1x128xf32> to vector<8x128xf32>
    %338 = arith.subf %336, %337 : vector<8x128xf32>
    %339 = arith.mulf %338, %338 : vector<8x128xf32>
    %340 = vector.extract_strided_slice %333 {offsets = [0, 1], sizes = [8, 1], strides = [1, 1]} : vector<8x3xf32> to vector<8x1xf32>
    %341 = vector.extract_strided_slice %8 {offsets = [1, 0], sizes = [1, 128], strides = [1, 1]} : vector<3x128xf32> to vector<1x128xf32>
    %342 = vector.broadcast %340 : vector<8x1xf32> to vector<8x128xf32>
    %343 = vector.broadcast %341 : vector<1x128xf32> to vector<8x128xf32>
    %344 = arith.subf %342, %343 : vector<8x128xf32>
    %345 = arith.mulf %344, %344 : vector<8x128xf32>
    %346 = arith.addf %339, %345 : vector<8x128xf32>
    %347 = vector.extract_strided_slice %333 {offsets = [0, 2], sizes = [8, 1], strides = [1, 1]} : vector<8x3xf32> to vector<8x1xf32>
    %348 = vector.extract_strided_slice %8 {offsets = [2, 0], sizes = [1, 128], strides = [1, 1]} : vector<3x128xf32> to vector<1x128xf32>
    %349 = vector.broadcast %347 : vector<8x1xf32> to vector<8x128xf32>
    %350 = vector.broadcast %348 : vector<1x128xf32> to vector<8x128xf32>
    %351 = arith.subf %349, %350 : vector<8x128xf32>
    %352 = arith.mulf %351, %351 : vector<8x128xf32>
    %353 = arith.addf %346, %352 : vector<8x128xf32>
    %354 = arith.minimumf %331, %353 : vector<8x128xf32>
    %c1_42 = arith.constant 1 : index
    %c56_43 = arith.constant 56 : index
    %c0_44 = arith.constant 0 : index
    %355 = vector.load %arg3[%c1_42, %c56_43, %c0_44] : memref<2x64x3xf32, #tpu.memory_space<vmem>>, vector<1x8x3xf32>
    %356 = vector.shape_cast %355 : vector<1x8x3xf32> to vector<8x3xf32>
    %357 = vector.extract_strided_slice %356 {offsets = [0, 0], sizes = [8, 1], strides = [1, 1]} : vector<8x3xf32> to vector<8x1xf32>
    %358 = vector.extract_strided_slice %8 {offsets = [0, 0], sizes = [1, 128], strides = [1, 1]} : vector<3x128xf32> to vector<1x128xf32>
    %359 = vector.broadcast %357 : vector<8x1xf32> to vector<8x128xf32>
    %360 = vector.broadcast %358 : vector<1x128xf32> to vector<8x128xf32>
    %361 = arith.subf %359, %360 : vector<8x128xf32>
    %362 = arith.mulf %361, %361 : vector<8x128xf32>
    %363 = vector.extract_strided_slice %356 {offsets = [0, 1], sizes = [8, 1], strides = [1, 1]} : vector<8x3xf32> to vector<8x1xf32>
    %364 = vector.extract_strided_slice %8 {offsets = [1, 0], sizes = [1, 128], strides = [1, 1]} : vector<3x128xf32> to vector<1x128xf32>
    %365 = vector.broadcast %363 : vector<8x1xf32> to vector<8x128xf32>
    %366 = vector.broadcast %364 : vector<1x128xf32> to vector<8x128xf32>
    %367 = arith.subf %365, %366 : vector<8x128xf32>
    %368 = arith.mulf %367, %367 : vector<8x128xf32>
    %369 = arith.addf %362, %368 : vector<8x128xf32>
    %370 = vector.extract_strided_slice %356 {offsets = [0, 2], sizes = [8, 1], strides = [1, 1]} : vector<8x3xf32> to vector<8x1xf32>
    %371 = vector.extract_strided_slice %8 {offsets = [2, 0], sizes = [1, 128], strides = [1, 1]} : vector<3x128xf32> to vector<1x128xf32>
    %372 = vector.broadcast %370 : vector<8x1xf32> to vector<8x128xf32>
    %373 = vector.broadcast %371 : vector<1x128xf32> to vector<8x128xf32>
    %374 = arith.subf %372, %373 : vector<8x128xf32>
    %375 = arith.mulf %374, %374 : vector<8x128xf32>
    %376 = arith.addf %369, %375 : vector<8x128xf32>
    %377 = arith.minimumf %354, %376 : vector<8x128xf32>
    %cst_45 = arith.constant dense<0x7F800000> : vector<128xf32>
    %378 = vector.multi_reduction <minimumf>, %377, %cst_45 [0] : vector<8x128xf32> to vector<128xf32>
    %379 = vector.shape_cast %378 : vector<128xf32> to vector<1x128xf32>
    %c0_46 = arith.constant 0 : index
    %c0_47 = arith.constant 0 : index
    %380 = vector.load %arg6[%c0_46, %c0_47] : memref<1x128xf32, #tpu.memory_space<vmem>>, vector<1x128xf32>
    %381 = arith.minimumf %380, %379 : vector<1x128xf32>
    %c0_48 = arith.constant 0 : index
    %c0_49 = arith.constant 0 : index
    %382 = vector.load %arg6[%c0_48, %c0_49] : memref<1x128xf32, #tpu.memory_space<vmem>>, vector<1x128xf32>
    tpu.vector_store %arg6[%c0_48, %c0_49], %381 {strides = array<i32>} : memref<1x128xf32, #tpu.memory_space<vmem>>, vector<1x128xf32>,
    %383 = arith.extui %5 : i1 to i32
    %c0_i32_50 = arith.constant 0 : i32
    %384 = arith.cmpi ne, %383, %c0_i32_50 : i32
    scf.if %384 {
      %c0_51 = arith.constant 0 : index
      %c0_52 = arith.constant 0 : index
      %385 = vector.load %arg6[%c0_51, %c0_52] : memref<1x128xf32, #tpu.memory_space<vmem>>, vector<1x128xf32>
      %c0_53 = arith.constant 0 : index
      %c0_54 = arith.constant 0 : index
      %386 = vector.load %arg5[%c0_53, %c0_54] : memref<1x128xf32, #tpu.memory_space<vmem>>, vector<1x128xf32>
      tpu.vector_store %arg5[%c0_53, %c0_54], %385 {strides = array<i32>} : memref<1x128xf32, #tpu.memory_space<vmem>>, vector<1x128xf32>,
    } else {
    }
    return
  }
  func.func @transform_0(%arg0: i32, %arg1: i32, %arg2: i32) -> (i32, i32, i32) {
    %c0_i32 = arith.constant 0 : i32
    %c0_i32_0 = arith.constant 0 : i32
    return %arg1, %arg2, %c0_i32 : i32, i32, i32
  }
  func.func @transform_1(%arg0: i32, %arg1: i32, %arg2: i32) -> (i32, i32) {
    %c0_i32 = arith.constant 0 : i32
    %c0_i32_0 = arith.constant 0 : i32
    return %c0_i32, %arg0 : i32, i32
  }
  func.func @transform_2(%arg0: i32, %arg1: i32, %arg2: i32) -> (i32, i32) {
    %c0_i32 = arith.constant 0 : i32
    %c0_i32_0 = arith.constant 0 : i32
    return %c0_i32, %arg0 : i32, i32
  }
}

</mosaic_0001>

<llo_original>
// kernel: tpu_custom_call.1
$region0: #{tpu_custom_call.1}
  #allocation0 [shape = 'u32[]', space=smem, size = 0x4, offset = 0x4, fixed_abs, tag = 'smem constant byte address 0x4 - core index']
  #allocation1 [shape = 'u32[144,128]{1,0:T(1,128)}', space=vmem, size = 0x12000, scoped, tag = 'internal scratch']
  #allocation2 [shape = 'f32[1,128]{1,0:T(1,128)}', space=vmem, size = 0x200, scoped, tag = 'scratch operand']
  %s0 = inlined_call_operand.vmem [shape: f32[2,64,3], index: 0, kind: input, shape index: {}]
  %s1 = inlined_call_operand.vmem [shape: f32[3,128], index: 1, kind: input, shape index: {}]
  %s2 = inlined_call_operand.hbm [shape: f32[1,128], index: 2, kind: output, shape index: {}]
  %s3 = sld [smem:[#allocation0]]
  $region26: #{tpu_custom_call.1} parent=0
    _
  %s5 = ssub.s32 1, %s3
  %s6 = scalar_select 0, %s5, %s3
  $region1: #{tpu_custom_call.1} parent=0
    #allocation3 [shape = 'u8[512]{0}', space=vmem, size = 0x400, scoped, tag = 'output window, operand 0, single buffered']
    #allocation4 [shape = 's32[1]{0}', space=sflag, size = 0x4, scoped, tag = 'scoped memory for tpu_custom_call.1']
    %7 = vsyncpa [#allocation4], 0
    // Predicated region
    $region2: #{tpu_custom_call.1} parent=1 // pred_check
      _
    $region3: #{tpu_custom_call.1} parent=1 // pred_check_branch
      %9 = sbr.rel (0) target = $region5
    $region4: #{tpu_custom_call.1} parent=1 // pred_region
      _
    $region5: #{tpu_custom_call.1} parent=1 // pred_fallthru
      _
    // Predicated region
    $region6: #{tpu_custom_call.1} parent=1 // pred_check
      _
    $region7: #{tpu_custom_call.1} parent=1 // pred_check_branch
      %11 = sbr.rel (0) target = $region9
    $region8: #{tpu_custom_call.1} parent=1 // pred_region
      _
    $region9: #{tpu_custom_call.1} parent=1 // pred_fallthru
      _
    %p12 = scmp.eq.s32.totalorder 0, 0
    %p13 = scmp.eq.s32.totalorder 0, 0
    %p14 = pnand %p12, %p13
    %p15 = pneg %p14
    // Predicated region
    $region10: #{tpu_custom_call.1} parent=1 // pred_check
      _
    $region11: #{tpu_custom_call.1} parent=1 // pred_check_branch
      %17 = sbr.rel (%p14) target = $region13
    $region12: #{tpu_custom_call.1} parent=1 // pred_region
      %18 = vst [vmem:[#allocation2] sm:$0x1] 3e+38
    $region13: #{tpu_custom_call.1} parent=1 // pred_fallthru
      _
    %v19 = vld [vmem:[%s1] sm:$0x7]
    %v20 = vld [vmem:[%s0] sm:$0xff]
    %22 = vset.pattern.permute.xlu0 0
    %23 = vperm.xlu0 %22, %v20
    %v24 = vpop.permute.xlu0 %23
    %v26 = vlaneseq
    %v27 = vshrl.u32 %v26, 7
    %v28 = vsub.s32 0, %v27
    %v29 = vrot.slane %v19, %v28
    %v30 = vsub.f32 %v24, %v29
    %v31 = vmul.f32 %v30, %v30
    %32 = vset.pattern.permute.xlu0 1
    %33 = vperm.xlu0 %32, %v20
    %v34 = vpop.permute.xlu0 %33
    %v36 = vlaneseq
    %v37 = vshrl.u32 %v36, 7
    %v38 = vsub.s32 1, %v37
    %v39 = vrot.slane %v19, %v38
    %v40 = vsub.f32 %v34, %v39
    %v41 = vmul.f32 %v40, %v40
    %v42 = vadd.f32 %v31, %v41
    %43 = vset.pattern.permute.xlu0 2
    %44 = vperm.xlu0 %43, %v20
    %v45 = vpop.permute.xlu0 %44
    %v47 = vlaneseq
    %v48 = vshrl.u32 %v47, 7
    %v49 = vsub.s32 2, %v48
    %v50 = vrot.slane %v19, %v49
    %v51 = vsub.f32 %v45, %v50
    %v52 = vmul.f32 %v51, %v51
    %v53 = vadd.f32 %v42, %v52
    %v54 = vmin.f32 %v53, 3e+38
    %v55 = vld [vmem:[%s0 + $0x8] sm:$0xff]
    %57 = vset.pattern.permute.xlu0 0
    %58 = vperm.xlu0 %57, %v55
    %v59 = vpop.permute.xlu0 %58
    %v61 = vsub.f32 %v59, %v29
    %v62 = vmul.f32 %v61, %v61
    %63 = vset.pattern.permute.xlu0 1
    %64 = vperm.xlu0 %63, %v55
    %v65 = vpop.permute.xlu0 %64
    %v67 = vsub.f32 %v65, %v39
    %v68 = vmul.f32 %v67, %v67
    %v69 = vadd.f32 %v62, %v68
    %70 = vset.pattern.permute.xlu0 2
    %71 = vperm.xlu0 %70, %v55
    %v72 = vpop.permute.xlu0 %71
    %v74 = vsub.f32 %v72, %v50
    %v75 = vmul.f32 %v74, %v74
    %v76 = vadd.f32 %v69, %v75
    %v77 = vmin.f32 %v54, %v76
    %v78 = vld [vmem:[%s0 + $0x10] sm:$0xff]
    %80 = vset.pattern.permute.xlu0 0
    %81 = vperm.xlu0 %80, %v78
    %v82 = vpop.permute.xlu0 %81
    %v84 = vsub.f32 %v82, %v29
    %v85 = vmul.f32 %v84, %v84
    %86 = vset.pattern.permute.xlu0 1
    %87 = vperm.xlu0 %86, %v78
    %v88 = vpop.permute.xlu0 %87
    %v90 = vsub.f32 %v88, %v39
    %v91 = vmul.f32 %v90, %v90
    %v92 = vadd.f32 %v85, %v91
    %93 = vset.pattern.permute.xlu0 2
    %94 = vperm.xlu0 %93, %v78
    %v95 = vpop.permute.xlu0 %94
    %v97 = vsub.f32 %v95, %v50
    %v98 = vmul.f32 %v97, %v97
    %v99 = vadd.f32 %v92, %v98
    %v100 = vmin.f32 %v77, %v99
    %v101 = vld [vmem:[%s0 + $0x18] sm:$0xff]
    %103 = vset.pattern.permute.xlu0 0
    %104 = vperm.xlu0 %103, %v101
    %v105 = vpop.permute.xlu0 %104
    %v107 = vsub.f32 %v105, %v29
    %v108 = vmul.f32 %v107, %v107
    %109 = vset.pattern.permute.xlu0 1
    %110 = vperm.xlu0 %109, %v101
    %v111 = vpop.permute.xlu0 %110
    %v113 = vsub.f32 %v111, %v39
    %v114 = vmul.f32 %v113, %v113
    %v115 = vadd.f32 %v108, %v114
    %116 = vset.pattern.permute.xlu0 2
    %117 = vperm.xlu0 %116, %v101
    %v118 = vpop.permute.xlu0 %117
    %v120 = vsub.f32 %v118, %v50
    %v121 = vmul.f32 %v120, %v120
    %v122 = vadd.f32 %v115, %v121
    %v123 = vmin.f32 %v100, %v122
    %v124 = vld [vmem:[%s0 + $0x20] sm:$0xff]
    %126 = vset.pattern.permute.xlu0 0
    %127 = vperm.xlu0 %126, %v124
    %v128 = vpop.permute.xlu0 %127
    %v130 = vsub.f32 %v128, %v29
    %v131 = vmul.f32 %v130, %v130
    %132 = vset.pattern.permute.xlu0 1
    %133 = vperm.xlu0 %132, %v124
    %v134 = vpop.permute.xlu0 %133
    %v136 = vsub.f32 %v134, %v39
    %v137 = vmul.f32 %v136, %v136
    %v138 = vadd.f32 %v131, %v137
    %139 = vset.pattern.permute.xlu0 2
    %140 = vperm.xlu0 %139, %v124
    %v141 = vpop.permute.xlu0 %140
    %v143 = vsub.f32 %v141, %v50
    %v144 = vmul.f32 %v143, %v143
    %v145 = vadd.f32 %v138, %v144
    %v146 = vmin.f32 %v123, %v145
    %v147 = vld [vmem:[%s0 + $0x28] sm:$0xff]
    %149 = vset.pattern.permute.xlu0 0
    %150 = vperm.xlu0 %149, %v147
    %v151 = vpop.permute.xlu0 %150
    %v153 = vsub.f32 %v151, %v29
    %v154 = vmul.f32 %v153, %v153
    %155 = vset.pattern.permute.xlu0 1
    %156 = vperm.xlu0 %155, %v147
    %v157 = vpop.permute.xlu0 %156
    %v159 = vsub.f32 %v157, %v39
    %v160 = vmul.f32 %v159, %v159
    %v161 = vadd.f32 %v154, %v160
    %162 = vset.pattern.permute.xlu0 2
    %163 = vperm.xlu0 %162, %v147
    %v164 = vpop.permute.xlu0 %163
    %v166 = vsub.f32 %v164, %v50
    %v167 = vmul.f32 %v166, %v166
    %v168 = vadd.f32 %v161, %v167
    %v169 = vmin.f32 %v146, %v168
    %v170 = vld [vmem:[%s0 + $0x30] sm:$0xff]
    %172 = vset.pattern.permute.xlu0 0
    %173 = vperm.xlu0 %172, %v170
    %v174 = vpop.permute.xlu0 %173
    %v176 = vsub.f32 %v174, %v29
    %v177 = vmul.f32 %v176, %v176
    %178 = vset.pattern.permute.xlu0 1
    %179 = vperm.xlu0 %178, %v170
    %v180 = vpop.permute.xlu0 %179
    %v182 = vsub.f32 %v180, %v39
    %v183 = vmul.f32 %v182, %v182
    %v184 = vadd.f32 %v177, %v183
    %185 = vset.pattern.permute.xlu0 2
    %186 = vperm.xlu0 %185, %v170
    %v187 = vpop.permute.xlu0 %186
    %v189 = vsub.f32 %v187, %v50
    %v190 = vmul.f32 %v189, %v189
    %v191 = vadd.f32 %v184, %v190
    %v192 = vmin.f32 %v169, %v191
    %v193 = vld [vmem:[%s0 + $0x38] sm:$0xff]
    %195 = vset.pattern.permute.xlu0 0
    %196 = vperm.xlu0 %195, %v193
    %v197 = vpop.permute.xlu0 %196
    %v199 = vsub.f32 %v197, %v29
    %v200 = vmul.f32 %v199, %v199
    %201 = vset.pattern.permute.xlu0 1
    %202 = vperm.xlu0 %201, %v193
    %v203 = vpop.permute.xlu0 %202
    %v205 = vsub.f32 %v203, %v39
    %v206 = vmul.f32 %v205, %v205
    %v207 = vadd.f32 %v200, %v206
    %208 = vset.pattern.permute.xlu0 2
    %209 = vperm.xlu0 %208, %v193
    %v210 = vpop.permute.xlu0 %209
    %v212 = vsub.f32 %v210, %v50
    %v213 = vmul.f32 %v212, %v212
    %v214 = vadd.f32 %v207, %v213
    %v215 = vmin.f32 %v192, %v214
    %s216 = scalar_lea.vmem %s0, 64
    %v217 = vld [vmem:[%s216] sm:$0xff]
    %219 = vset.pattern.permute.xlu0 0
    %220 = vperm.xlu0 %219, %v217
    %v221 = vpop.permute.xlu0 %220
    %v223 = vsub.f32 %v221, %v29
    %v224 = vmul.f32 %v223, %v223
    %225 = vset.pattern.permute.xlu0 1
    %226 = vperm.xlu0 %225, %v217
    %v227 = vpop.permute.xlu0 %226
    %v229 = vsub.f32 %v227, %v39
    %v230 = vmul.f32 %v229, %v229
    %v231 = vadd.f32 %v224, %v230
    %232 = vset.pattern.permute.xlu0 2
    %233 = vperm.xlu0 %232, %v217
    %v234 = vpop.permute.xlu0 %233
    %v236 = vsub.f32 %v234, %v50
    %v237 = vmul.f32 %v236, %v236
    %v238 = vadd.f32 %v231, %v237
    %v239 = vmin.f32 %v215, %v238
    %v240 = vld [vmem:[%s216 + $0x8] sm:$0xff]
    %242 = vset.pattern.permute.xlu0 0
    %243 = vperm.xlu0 %242, %v240
    %v244 = vpop.permute.xlu0 %243
    %v246 = vsub.f32 %v244, %v29
    %v247 = vmul.f32 %v246, %v246
    %248 = vset.pattern.permute.xlu0 1
    %249 = vperm.xlu0 %248, %v240
    %v250 = vpop.permute.xlu0 %249
    %v252 = vsub.f32 %v250, %v39
    %v253 = vmul.f32 %v252, %v252
    %v254 = vadd.f32 %v247, %v253
    %255 = vset.pattern.permute.xlu0 2
    %256 = vperm.xlu0 %255, %v240
    %v257 = vpop.permute.xlu0 %256
    %v259 = vsub.f32 %v257, %v50
    %v260 = vmul.f32 %v259, %v259
    %v261 = vadd.f32 %v254, %v260
    %v262 = vmin.f32 %v239, %v261
    %v263 = vld [vmem:[%s216 + $0x10] sm:$0xff]
    %265 = vset.pattern.permute.xlu0 0
    %266 = vperm.xlu0 %265, %v263
    %v267 = vpop.permute.xlu0 %266
    %v269 = vsub.f32 %v267, %v29
    %v270 = vmul.f32 %v269, %v269
    %271 = vset.pattern.permute.xlu0 1
    %272 = vperm.xlu0 %271, %v263
    %v273 = vpop.permute.xlu0 %272
    %v275 = vsub.f32 %v273, %v39
    %v276 = vmul.f32 %v275, %v275
    %v277 = vadd.f32 %v270, %v276
    %278 = vset.pattern.permute.xlu0 2
    %279 = vperm.xlu0 %278, %v263
    %v280 = vpop.permute.xlu0 %279
    %v282 = vsub.f32 %v280, %v50
    %v283 = vmul.f32 %v282, %v282
    %v284 = vadd.f32 %v277, %v283
    %v285 = vmin.f32 %v262, %v284
    %v286 = vld [vmem:[%s216 + $0x18] sm:$0xff]
    %288 = vset.pattern.permute.xlu0 0
    %289 = vperm.xlu0 %288, %v286
    %v290 = vpop.permute.xlu0 %289
    %v292 = vsub.f32 %v290, %v29
    %v293 = vmul.f32 %v292, %v292
    %294 = vset.pattern.permute.xlu0 1
    %295 = vperm.xlu0 %294, %v286
    %v296 = vpop.permute.xlu0 %295
    %v298 = vsub.f32 %v296, %v39
    %v299 = vmul.f32 %v298, %v298
    %v300 = vadd.f32 %v293, %v299
    %301 = vset.pattern.permute.xlu0 2
    %302 = vperm.xlu0 %301, %v286
    %v303 = vpop.permute.xlu0 %302
    %v305 = vsub.f32 %v303, %v50
    %v306 = vmul.f32 %v305, %v305
    %v307 = vadd.f32 %v300, %v306
    %v308 = vmin.f32 %v285, %v307
    %v309 = vld [vmem:[%s216 + $0x20] sm:$0xff]
    %311 = vset.pattern.permute.xlu0 0
    %312 = vperm.xlu0 %311, %v309
    %v313 = vpop.permute.xlu0 %312
    %v315 = vsub.f32 %v313, %v29
    %v316 = vmul.f32 %v315, %v315
    %317 = vset.pattern.permute.xlu0 1
    %318 = vperm.xlu0 %317, %v309
    %v319 = vpop.permute.xlu0 %318
    %v321 = vsub.f32 %v319, %v39
    %v322 = vmul.f32 %v321, %v321
    %v323 = vadd.f32 %v316, %v322
    %324 = vset.pattern.permute.xlu0 2
    %325 = vperm.xlu0 %324, %v309
    %v326 = vpop.permute.xlu0 %325
    %v328 = vsub.f32 %v326, %v50
    %v329 = vmul.f32 %v328, %v328
    %v330 = vadd.f32 %v323, %v329
    %v331 = vmin.f32 %v308, %v330
    %v332 = vld [vmem:[%s216 + $0x28] sm:$0xff]
    %334 = vset.pattern.permute.xlu0 0
    %335 = vperm.xlu0 %334, %v332
    %v336 = vpop.permute.xlu0 %335
    %v338 = vsub.f32 %v336, %v29
    %v339 = vmul.f32 %v338, %v338
    %340 = vset.pattern.permute.xlu0 1
    %341 = vperm.xlu0 %340, %v332
    %v342 = vpop.permute.xlu0 %341
    %v344 = vsub.f32 %v342, %v39
    %v345 = vmul.f32 %v344, %v344
    %v346 = vadd.f32 %v339, %v345
    %347 = vset.pattern.permute.xlu0 2
    %348 = vperm.xlu0 %347, %v332
    %v349 = vpop.permute.xlu0 %348
    %v351 = vsub.f32 %v349, %v50
    %v352 = vmul.f32 %v351, %v351
    %v353 = vadd.f32 %v346, %v352
    %v354 = vmin.f32 %v331, %v353
    %v355 = vld [vmem:[%s216 + $0x30] sm:$0xff]
    %357 = vset.pattern.permute.xlu0 0
    %358 = vperm.xlu0 %357, %v355
    %v359 = vpop.permute.xlu0 %358
    %v361 = vsub.f32 %v359, %v29
    %v362 = vmul.f32 %v361, %v361
    %363 = vset.pattern.permute.xlu0 1
    %364 = vperm.xlu0 %363, %v355
    %v365 = vpop.permute.xlu0 %364
    %v367 = vsub.f32 %v365, %v39
    %v368 = vmul.f32 %v367, %v367
    %v369 = vadd.f32 %v362, %v368
    %370 = vset.pattern.permute.xlu0 2
    %371 = vperm.xlu0 %370, %v355
    %v372 = vpop.permute.xlu0 %371
    %v374 = vsub.f32 %v372, %v50
    %v375 = vmul.f32 %v374, %v374
    %v376 = vadd.f32 %v369, %v375
    %v377 = vmin.f32 %v354, %v376
    %v378 = vld [vmem:[%s216 + $0x38] sm:$0xff]
    %380 = vset.pattern.permute.xlu0 0
    %381 = vperm.xlu0 %380, %v378
    %v382 = vpop.permute.xlu0 %381
    %v384 = vsub.f32 %v382, %v29
    %v385 = vmul.f32 %v384, %v384
    %386 = vset.pattern.permute.xlu0 1
    %387 = vperm.xlu0 %386, %v378
    %v388 = vpop.permute.xlu0 %387
    %v390 = vsub.f32 %v388, %v39
    %v391 = vmul.f32 %v390, %v390
    %v392 = vadd.f32 %v385, %v391
    %393 = vset.pattern.permute.xlu0 2
    %394 = vperm.xlu0 %393, %v378
    %v395 = vpop.permute.xlu0 %394
    %v397 = vsub.f32 %v395, %v50
    %v398 = vmul.f32 %v397, %v397
    %v399 = vadd.f32 %v392, %v398
    %v400 = vmin.f32 %v377, %v399
    %v401 = vrot.slane %v400, 4
    %v402 = vmin.f32 %v400, %v401
    %v403 = vrot.slane %v402, 2
    %v404 = vmin.f32 %v402, %v403
    %v405 = vrot.slane %v404, 1
    %v406 = vmin.f32 %v404, %v405
    %v407 = vld [vmem:[#allocation2] sm:$0x1]
    %v408 = vmin.f32 %v407, %v406
    %409 = vst [vmem:[#allocation2] sm:$0x1] %v408
    // Predicated region
    $region14: #{tpu_custom_call.1} parent=1 // pred_check
      _
    $region15: #{tpu_custom_call.1} parent=1 // pred_check_branch
      %411 = sbr.rel (%p14) target = $region17
    $region16: #{tpu_custom_call.1} parent=1 // pred_region
      %v412 = vld [vmem:[#allocation2] sm:$0x1]
      %413 = vst [vmem:[#allocation3] sm:$0x1] %v412
    $region17: #{tpu_custom_call.1} parent=1 // pred_fallthru
      _
    // Predicated region
    $region18: #{tpu_custom_call.1} parent=1 // pred_check
      _
    $region19: #{tpu_custom_call.1} parent=1 // pred_check_branch
      %415 = sbr.rel (0) target = $region21
    $region20: #{tpu_custom_call.1} parent=1 // pred_region
      %s417 = ssub.s32 16, 16
      %418 = vsyncadd [#allocation4], %s417
      %s420 = sshll.u32 [#allocation3], 4
      %s421 = int_to_ptr.vmem [resolvable:$true] %s420
      %423 = dma.vmem_to_hbm [thread:$0]  %s421, 16, %s2, [#allocation4]
    $region21: #{tpu_custom_call.1} parent=1 // pred_fallthru
      _
    // Predicated region
    $region22: #{tpu_custom_call.1} parent=1 // pred_check
      _
    $region23: #{tpu_custom_call.1} parent=1 // pred_check_branch
      %425 = sbr.rel (0) target = $region25
    $region24: #{tpu_custom_call.1} parent=1 // pred_region
      %426 = dma.done [#allocation4], 16
    $region25: #{tpu_custom_call.1} parent=1 // pred_fallthru
      _
    %427 = vsyncpa [#allocation4], 1

</llo_original>
